<compile_context>
chip_gen: v6e
topology: v6e:2x2x1
jax: 0.10.0
libtpu: 0.0.40
codegen_flags: <defaults>
</compile_context>

<pallas_src>
import functools

import jax
import jax.numpy as jnp
from jax.experimental import pallas as pl
from jax.experimental.pallas import tpu as pltpu


def _round_up(x: int, m: int) -> int:
    return ((x + m - 1) // m) * m


def _choose_block_rows(n_rows: int, per_row_tile_bytes: int, row_align: int) -> int:
    """Pick the row-tile size from a lane-padded byte budget.

    `per_row_tile_bytes` must already account for (8,128) lane padding of every
    per-row input buffer.  24 MiB for all double-buffered input tiles keeps the
    kernel well inside v7x's 64 MiB physical VMEM (with headroom for alpha, the
    output block and internal scratch) and inside the raised vmem_limit below
    on v5e/v6e (128 MiB physical).  Multi-MiB tiles amortize the ~0.35 us
    per-grid-step overhead (85%+ of HBM roofline in measured sweeps).
    """
    budget = 24 * 1024 * 1024
    max_rows = (budget // max(1, 2 * per_row_tile_bytes)) // row_align * row_align
    max_rows = max(row_align, max_rows)
    # Keep >= 2 grid steps when there is enough data so the "parallel" batch
    # axis can shard across v7x's two TensorCores.
    half = _round_up(pl.cdiv(n_rows, 2), row_align)
    tm = min(max_rows, half)
    if tm >= n_rows:
        tm = n_rows            # full-extent block: always a legal block shape
    return max(1, tm)


def _int_pow(x, g: int):
    """x^g for small integer g via a trace-time-unrolled multiply chain (VPU only)."""
    result = None
    base = x
    while g:
        if g & 1:
            result = base if result is None else result * base
        g >>= 1
        if g:
            base = base * base
    return jnp.ones_like(x) if result is None else result


def _focal(one_minus, gamma: float):
    g = float(gamma)
    if g.is_integer() and 0 <= g <= 16:
        return _int_pow(one_minus, int(g))            # VPU multiplies, no EUP pow
    return jnp.power(one_minus, jnp.float32(g))       # non-integer gamma fallback


def _focal_loss_packed_kernel(hot_ref, probs_ref, alpha_ref, out_ref, *,
                              gamma: float, k: int, n_rows: int):
    """Lane-dense path: each probs row holds k = 128//C samples."""
    tm = probs_ref.shape[0]
    tile = pl.program_id(0)

    p = probs_ref[...].astype(jnp.float32)            # (TM, 128), all lanes live
    col_ids = jax.lax.broadcasted_iota(jnp.int32, p.shape, 1)
    hot = hot_ref[...]                                # (TM, k) int32 hot columns

    # Select each sample's target-class probability; everything else stays 1.0
    # so log(1)=0 and (1-p)^gamma=0 give an exact zero contribution.
    p_t = jnp.ones_like(p)
    for s in range(k):                                # trace-time unrolled
        p_t = jnp.where(col_ids == hot[:, s:s + 1], p, p_t)

    focal = _focal(1.0 - p_t, gamma)
    neg_log_p = -jnp.log(p_t)                         # single EUP transcendental
    alpha_row = alpha_ref[...].astype(jnp.float32)    # (1, 128) = alpha[col % C]
    contrib = alpha_row * focal * neg_log_p           # nonzero only at hot cols

    row_sum = jnp.sum(contrib, axis=1, keepdims=True)      # (TM, 1) lane reduce
    # Cheap (TM,1) row-valid select: rows past the end of the last partial grid
    # tile hold garbage VMEM; the select also discards any NaN/Inf they made.
    rid = jax.lax.broadcasted_iota(jnp.int32, (tm, 1), 0) + tile * tm
    row_sum = jnp.where(rid < n_rows, row_sum, 0.0)
    out_ref[...] = jnp.sum(row_sum).reshape(1, 1, 1)


def _focal_loss_general_kernel(targets_ref, probs_ref, alpha_ref, out_ref, *,
                               gamma: float, n_rows: int):
    """General-C path: reduce to per-sample (TM,1) before log / pow (EUP saver)."""
    tm, c = probs_ref.shape
    tile = pl.program_id(0)

    p = probs_ref[...].astype(jnp.float32)            # (TM, C)
    t = targets_ref[...]                              # (TM, 1) int32
    col_ids = jax.lax.broadcasted_iota(jnp.int32, (tm, c), 1)
    mask = col_ids == t                               # one-hot of the target

    alpha_row = alpha_ref[...].astype(jnp.float32)    # (1, C)
    p_i = jnp.sum(jnp.where(mask, p, 0.0), axis=1, keepdims=True)          # P[i,t_i]
    a_i = jnp.sum(jnp.where(mask, alpha_row, 0.0), axis=1, keepdims=True)  # alpha[t_i]

    focal = _focal(1.0 - p_i, gamma)
    row_loss = a_i * focal * (-jnp.log(p_i))          # (TM, 1): log on TM values only

    rid = jax.lax.broadcasted_iota(jnp.int32, (tm, 1), 0) + tile * tm
    row_loss = jnp.where(rid < n_rows, row_loss, 0.0)
    out_ref[...] = jnp.sum(row_loss).reshape(1, 1, 1)


def focal_loss(probs, targets, alpha, *, gamma=2.0, size_average=True):
    """probs: (N, C) probabilities (f32 or bf16); targets: (N,) int; alpha: (C,) or (C,1)."""
    N, C = probs.shape
    if probs.dtype not in (jnp.dtype(jnp.float32), jnp.dtype(jnp.bfloat16)):
        probs = probs.astype(jnp.float32)
    targets = targets.astype(jnp.int32).reshape(-1)
    alpha_flat = jnp.asarray(alpha, jnp.float32).reshape(-1)   # (C,)

    row_align = 16 if probs.dtype == jnp.dtype(jnp.bfloat16) else 8
    itemsize = probs.dtype.itemsize

    lane_pack = (2 <= C < 128) and (128 % C == 0)
    if lane_pack:
        # ---- lane-dense packed path: (N, C) -> (N/k, 128), k = 128 // C ----
        k = 128 // C
        n_pad = _round_up(N, k)
        # Hot packed column per sample: slot*C + target; -1 for padding
        # (never matches any column -> exact zero contribution).
        hot = (jnp.arange(N, dtype=jnp.int32) % k) * C + targets
        if n_pad != N:
            # TODO(synk): the tail pad copies probs once in HBM; a ragged-tail
            # epilogue would avoid that copy for N not divisible by 128//C.
            probs = jnp.pad(probs, ((0, n_pad - N), (0, 0)))
            hot = jnp.pad(hot, (0, n_pad - N), constant_values=-1)
        probs_in = probs.reshape(n_pad // k, k * C)            # free: contiguous
        hot2d = hot.reshape(n_pad // k, k)
        alpha_in = jnp.tile(alpha_flat, k).reshape(1, k * C)   # alpha[col % C]

        n_rows = n_pad // k
        per_row_bytes = (k * C) * itemsize + _round_up(k, 128) * 4   # probs + hot
        tm = _choose_block_rows(n_rows, per_row_bytes, row_align)
        num_tiles = pl.cdiv(n_rows, tm)

        kernel = functools.partial(_focal_loss_packed_kernel,
                                   gamma=float(gamma), k=k, n_rows=n_rows)
        in_specs = [
            pl.BlockSpec((tm, k), lambda i: (i, 0)),           # hot columns
            pl.BlockSpec((tm, k * C), lambda i: (i, 0)),       # lane-dense probs
            pl.BlockSpec((1, k * C), lambda i: (0, 0)),        # alpha (resident)
        ]
        args = (hot2d, probs_in, alpha_in)
    else:
        # ---- general path: (TM, C) tiles, per-row reduce before log/pow ----
        targets2d = targets.reshape(N, 1)
        alpha_in = alpha_flat.reshape(1, C)

        n_rows = N
        per_row_bytes = _round_up(C, 128) * itemsize + 128 * 4  # probs + targets
        tm = _choose_block_rows(n_rows, per_row_bytes, row_align)
        num_tiles = pl.cdiv(n_rows, tm)

        kernel = functools.partial(_focal_loss_general_kernel,
                                   gamma=float(gamma), n_rows=n_rows)
        in_specs = [
            pl.BlockSpec((tm, 1), lambda i: (i, 0)),           # targets
            pl.BlockSpec((tm, C), lambda i: (i, 0)),           # probs tile
            pl.BlockSpec((1, C), lambda i: (0, 0)),            # alpha (resident)
        ]
        args = (targets2d, probs, alpha_in)

    partials = pl.pallas_call(
        kernel,
        out_shape=jax.ShapeDtypeStruct((num_tiles, 1, 1), jnp.float32),
        grid=(num_tiles,),
        in_specs=in_specs,
        out_specs=pl.BlockSpec((1, 1, 1), lambda i: (i, 0, 0)),  # per-tile partials
        compiler_params=pltpu.CompilerParams(
            dimension_semantics=("parallel",),        # shards across v7x's 2 TCs
            vmem_limit_bytes=40 * 1024 * 1024),       # > v5e's 16 MiB default,
                                                      # < v7x's 64 MiB physical
    )(*args)

    total = jnp.sum(partials)
    scale = (1.0 / N) if size_average else 1.0        # 1/N folded as a constant
    return total * scale


def focal_loss_reference(probs, targets, alpha, *, gamma=2.0, size_average=True):
    N, C = probs.shape
    mask = jax.nn.one_hot(targets, C, dtype=jnp.float32)
    p = jnp.sum(probs.astype(jnp.float32) * mask, axis=1)
    a = jnp.asarray(alpha, jnp.float32).reshape(-1)[targets]
    bl = -a * jnp.power(1.0 - p, gamma) * jnp.log(p)
    return jnp.mean(bl) if size_average else jnp.sum(bl)


if __name__ == "__main__":
    class_num = 8
    N = 16

    key = jax.random.PRNGKey(0)
    k_logits, k_targets = jax.random.split(key)

    # Module expects probabilities (it calls .log() directly) -> softmax here.
    logits = jax.random.normal(k_logits, (N, class_num), dtype=jnp.float32)
    probs = jax.nn.softmax(logits, axis=-1)
    targets = jax.random.randint(k_targets, (N,), 0, class_num, dtype=jnp.int32)

    # Deterministic parameter init, matching nn.Module __init__ (alpha=None):
    alpha = jnp.ones((class_num, 1), dtype=jnp.float32)

    loss = focal_loss(probs, targets, alpha, gamma=2.0, size_average=True)
    loss = jax.block_until_ready(loss)

    ref = focal_loss_reference(probs, targets, alpha, gamma=2.0, size_average=True)
    assert jnp.allclose(loss, ref, rtol=1e-5, atol=1e-6), (loss, ref)

    print("KERNEL_OK")
</pallas_src>

<mosaic_0001>
module attributes {stable_mosaic.version = 11 : i64} {
  func.func @_focal_loss_packed_kernel(%arg0: i32, %arg1: memref<1x16xi32, #tpu.memory_space<vmem>>, %arg2: memref<1x128xf32, #tpu.memory_space<vmem>>, %arg3: memref<1x128xf32, #tpu.memory_space<vmem>>, %arg4: memref<1x1x1xf32, #tpu.memory_space<vmem>>) attributes {dimension_semantics = [#tpu.dimension_semantics<parallel>], iteration_bounds = array<i64: 1>, scalar_prefetch = 0 : i64, scratch_operands = 0 : i64, tpu.core_type = #tpu.core_type<tc>, window_params = [{transform_indices = @transform_0, window_bounds = array<i64: 1, 16>}, {transform_indices = @transform_1, window_bounds = array<i64: 1, 128>}, {pipeline_mode = #tpu.pipeline_mode<synchronous>, transform_indices = @transform_2, window_bounds = array<i64: 1, 128>}, {transform_indices = @transform_3, window_bounds = array<i64: 1, 1, 1>}]} {
    %c0 = arith.constant 0 : index
    %c0_0 = arith.constant 0 : index
    %0 = vector.load %arg2[%c0, %c0_0] : memref<1x128xf32, #tpu.memory_space<vmem>>, vector<1x128xf32>
    %1 = tpu.iota {dimensions = array<i32: 1>} : vector<1x128xi32>
    %c0_1 = arith.constant 0 : index
    %c0_2 = arith.constant 0 : index
    %2 = vector.load %arg1[%c0_1, %c0_2] : memref<1x16xi32, #tpu.memory_space<vmem>>, vector<1x16xi32>
    %cst = arith.constant 1.000000e+00 : f32
    %3 = vector.broadcast %cst : f32 to vector<1x128xf32>
    %4 = vector.extract_strided_slice %2 {offsets = [0, 0], sizes = [1, 1], strides = [1, 1]} : vector<1x16xi32> to vector<1x1xi32>
    %5 = vector.broadcast %4 : vector<1x1xi32> to vector<1x128xi32>
    %6 = arith.cmpi eq, %1, %5 : vector<1x128xi32>
    %7 = arith.select %6, %0, %3 : vector<1x128xi1>, vector<1x128xf32>
    %8 = vector.extract_strided_slice %2 {offsets = [0, 1], sizes = [1, 1], strides = [1, 1]} : vector<1x16xi32> to vector<1x1xi32>
    %9 = vector.broadcast %8 : vector<1x1xi32> to vector<1x128xi32>
    %10 = arith.cmpi eq, %1, %9 : vector<1x128xi32>
    %11 = arith.select %10, %0, %7 : vector<1x128xi1>, vector<1x128xf32>
    %12 = vector.extract_strided_slice %2 {offsets = [0, 2], sizes = [1, 1], strides = [1, 1]} : vector<1x16xi32> to vector<1x1xi32>
    %13 = vector.broadcast %12 : vector<1x1xi32> to vector<1x128xi32>
    %14 = arith.cmpi eq, %1, %13 : vector<1x128xi32>
    %15 = arith.select %14, %0, %11 : vector<1x128xi1>, vector<1x128xf32>
    %16 = vector.extract_strided_slice %2 {offsets = [0, 3], sizes = [1, 1], strides = [1, 1]} : vector<1x16xi32> to vector<1x1xi32>
    %17 = vector.broadcast %16 : vector<1x1xi32> to vector<1x128xi32>
    %18 = arith.cmpi eq, %1, %17 : vector<1x128xi32>
    %19 = arith.select %18, %0, %15 : vector<1x128xi1>, vector<1x128xf32>
    %20 = vector.extract_strided_slice %2 {offsets = [0, 4], sizes = [1, 1], strides = [1, 1]} : vector<1x16xi32> to vector<1x1xi32>
    %21 = vector.broadcast %20 : vector<1x1xi32> to vector<1x128xi32>
    %22 = arith.cmpi eq, %1, %21 : vector<1x128xi32>
    %23 = arith.select %22, %0, %19 : vector<1x128xi1>, vector<1x128xf32>
    %24 = vector.extract_strided_slice %2 {offsets = [0, 5], sizes = [1, 1], strides = [1, 1]} : vector<1x16xi32> to vector<1x1xi32>
    %25 = vector.broadcast %24 : vector<1x1xi32> to vector<1x128xi32>
    %26 = arith.cmpi eq, %1, %25 : vector<1x128xi32>
    %27 = arith.select %26, %0, %23 : vector<1x128xi1>, vector<1x128xf32>
    %28 = vector.extract_strided_slice %2 {offsets = [0, 6], sizes = [1, 1], strides = [1, 1]} : vector<1x16xi32> to vector<1x1xi32>
    %29 = vector.broadcast %28 : vector<1x1xi32> to vector<1x128xi32>
    %30 = arith.cmpi eq, %1, %29 : vector<1x128xi32>
    %31 = arith.select %30, %0, %27 : vector<1x128xi1>, vector<1x128xf32>
    %32 = vector.extract_strided_slice %2 {offsets = [0, 7], sizes = [1, 1], strides = [1, 1]} : vector<1x16xi32> to vector<1x1xi32>
    %33 = vector.broadcast %32 : vector<1x1xi32> to vector<1x128xi32>
    %34 = arith.cmpi eq, %1, %33 : vector<1x128xi32>
    %35 = arith.select %34, %0, %31 : vector<1x128xi1>, vector<1x128xf32>
    %36 = vector.extract_strided_slice %2 {offsets = [0, 8], sizes = [1, 1], strides = [1, 1]} : vector<1x16xi32> to vector<1x1xi32>
    %37 = vector.broadcast %36 : vector<1x1xi32> to vector<1x128xi32>
    %38 = arith.cmpi eq, %1, %37 : vector<1x128xi32>
    %39 = arith.select %38, %0, %35 : vector<1x128xi1>, vector<1x128xf32>
    %40 = vector.extract_strided_slice %2 {offsets = [0, 9], sizes = [1, 1], strides = [1, 1]} : vector<1x16xi32> to vector<1x1xi32>
    %41 = vector.broadcast %40 : vector<1x1xi32> to vector<1x128xi32>
    %42 = arith.cmpi eq, %1, %41 : vector<1x128xi32>
    %43 = arith.select %42, %0, %39 : vector<1x128xi1>, vector<1x128xf32>
    %44 = vector.extract_strided_slice %2 {offsets = [0, 10], sizes = [1, 1], strides = [1, 1]} : vector<1x16xi32> to vector<1x1xi32>
    %45 = vector.broadcast %44 : vector<1x1xi32> to vector<1x128xi32>
    %46 = arith.cmpi eq, %1, %45 : vector<1x128xi32>
    %47 = arith.select %46, %0, %43 : vector<1x128xi1>, vector<1x128xf32>
    %48 = vector.extract_strided_slice %2 {offsets = [0, 11], sizes = [1, 1], strides = [1, 1]} : vector<1x16xi32> to vector<1x1xi32>
    %49 = vector.broadcast %48 : vector<1x1xi32> to vector<1x128xi32>
    %50 = arith.cmpi eq, %1, %49 : vector<1x128xi32>
    %51 = arith.select %50, %0, %47 : vector<1x128xi1>, vector<1x128xf32>
    %52 = vector.extract_strided_slice %2 {offsets = [0, 12], sizes = [1, 1], strides = [1, 1]} : vector<1x16xi32> to vector<1x1xi32>
    %53 = vector.broadcast %52 : vector<1x1xi32> to vector<1x128xi32>
    %54 = arith.cmpi eq, %1, %53 : vector<1x128xi32>
    %55 = arith.select %54, %0, %51 : vector<1x128xi1>, vector<1x128xf32>
    %56 = vector.extract_strided_slice %2 {offsets = [0, 13], sizes = [1, 1], strides = [1, 1]} : vector<1x16xi32> to vector<1x1xi32>
    %57 = vector.broadcast %56 : vector<1x1xi32> to vector<1x128xi32>
    %58 = arith.cmpi eq, %1, %57 : vector<1x128xi32>
    %59 = arith.select %58, %0, %55 : vector<1x128xi1>, vector<1x128xf32>
    %60 = vector.extract_strided_slice %2 {offsets = [0, 14], sizes = [1, 1], strides = [1, 1]} : vector<1x16xi32> to vector<1x1xi32>
    %61 = vector.broadcast %60 : vector<1x1xi32> to vector<1x128xi32>
    %62 = arith.cmpi eq, %1, %61 : vector<1x128xi32>
    %63 = arith.select %62, %0, %59 : vector<1x128xi1>, vector<1x128xf32>
    %64 = vector.extract_strided_slice %2 {offsets = [0, 15], sizes = [1, 1], strides = [1, 1]} : vector<1x16xi32> to vector<1x1xi32>
    %65 = vector.broadcast %64 : vector<1x1xi32> to vector<1x128xi32>
    %66 = arith.cmpi eq, %1, %65 : vector<1x128xi32>
    %67 = arith.select %66, %0, %63 : vector<1x128xi1>, vector<1x128xf32>
    %cst_3 = arith.constant 1.000000e+00 : f32
    %68 = vector.broadcast %cst_3 : f32 to vector<1x128xf32>
    %69 = arith.subf %68, %67 : vector<1x128xf32>
    %70 = arith.mulf %69, %69 : vector<1x128xf32>
    %71 = math.log %67 : vector<1x128xf32>
    %cst_4 = arith.constant 0.000000e+00 : f32
    %72 = vector.broadcast %cst_4 : f32 to vector<1x128xf32>
    %73 = arith.subf %72, %71 : vector<1x128xf32>
    %c0_5 = arith.constant 0 : index
    %c0_6 = arith.constant 0 : index
    %74 = vector.load %arg3[%c0_5, %c0_6] : memref<1x128xf32, #tpu.memory_space<vmem>>, vector<1x128xf32>
    %75 = arith.mulf %74, %70 : vector<1x128xf32>
    %76 = arith.mulf %75, %73 : vector<1x128xf32>
    %cst_7 = arith.constant dense<0.000000e+00> : vector<1xf32>
    %77 = vector.multi_reduction <add>, %76, %cst_7 [1] : vector<1x128xf32> to vector<1xf32>
    %78 = vector.shape_cast %77 : vector<1xf32> to vector<1x1xf32>
    %79 = tpu.iota {dimensions = array<i32: 0>} : vector<1x1xi32>
    %c1_i32 = arith.constant 1 : i32
    %80 = arith.muli %arg0, %c1_i32 : i32
    %81 = vector.broadcast %80 : i32 to vector<1x1xi32>
    %82 = arith.addi %79, %81 : vector<1x1xi32>
    %c1_i32_8 = arith.constant 1 : i32
    %83 = vector.broadcast %c1_i32_8 : i32 to vector<1x1xi32>
    %84 = arith.cmpi slt, %82, %83 : vector<1x1xi32>
    %cst_9 = arith.constant 0.000000e+00 : f32
    %85 = vector.broadcast %cst_9 : f32 to vector<1x1xf32>
    %86 = arith.select %84, %78, %85 : vector<1x1xi1>, vector<1x1xf32>
    %87 = vector.shape_cast %86 : vector<1x1xf32> to vector<1x1x1xf32>
    %cst_10 = arith.constant dense<0.000000e+00> : vector<1xf32>
    %88 = vector.multi_reduction <add>, %87, %cst_10 [1, 2] : vector<1x1x1xf32> to vector<1xf32>
    %89 = vector.shape_cast %88 : vector<1xf32> to vector<1x1x1xf32>
    %90 = vector.extract %89[0, 0, 0] : f32 from vector<1x1x1xf32>
    %91 = vector.broadcast %90 : f32 to vector<1x1x1xf32>
    %c0_11 = arith.constant 0 : index
    %c0_12 = arith.constant 0 : index
    %c0_13 = arith.constant 0 : index
    %92 = vector.load %arg4[%c0_11, %c0_12, %c0_13] : memref<1x1x1xf32, #tpu.memory_space<vmem>>, vector<1x1x1xf32>
    tpu.vector_store %arg4[%c0_11, %c0_12, %c0_13], %91 {strides = array<i32>} : memref<1x1x1xf32, #tpu.memory_space<vmem>>, vector<1x1x1xf32>,
    return
  }
  func.func @transform_0(%arg0: i32) -> (i32, i32) {
    %c0_i32 = arith.constant 0 : i32
    %c0_i32_0 = arith.constant 0 : i32
    return %arg0, %c0_i32 : i32, i32
  }
  func.func @transform_1(%arg0: i32) -> (i32, i32) {
    %c0_i32 = arith.constant 0 : i32
    %c0_i32_0 = arith.constant 0 : i32
    return %arg0, %c0_i32 : i32, i32
  }
  func.func @transform_2(%arg0: i32) -> (i32, i32) {
    %c0_i32 = arith.constant 0 : i32
    %c0_i32_0 = arith.constant 0 : i32
    %c0_i32_1 = arith.constant 0 : i32
    return %c0_i32, %c0_i32_0 : i32, i32
  }
  func.func @transform_3(%arg0: i32) -> (i32, i32, i32) {
    %c0_i32 = arith.constant 0 : i32
    %c0_i32_0 = arith.constant 0 : i32
    %c0_i32_1 = arith.constant 0 : i32
    return %arg0, %c0_i32, %c0_i32_0 : i32, i32, i32
  }
}

</mosaic_0001>

<llo_original>
// kernel: tpu_custom_call.1
$region0: #{tpu_custom_call.1}
  #allocation0 [shape = 'u32[]', space=smem, size = 0x4, offset = 0x4, fixed_abs, tag = 'smem constant byte address 0x4 - core index']
  #allocation1 [shape = 'u32[144,128]{1,0:T(1,128)}', space=vmem, size = 0x12000, scoped, tag = 'internal scratch']
  %s0 = inlined_call_operand.hbm [shape: s32[1,16], index: 0, kind: input, shape index: {}]
  %s1 = inlined_call_operand.vmem [shape: f32[1,128], index: 1, kind: input, shape index: {}]
  %s2 = inlined_call_operand.vmem [shape: f32[1,128], index: 2, kind: input, shape index: {}]
  %s3 = inlined_call_operand.hbm [shape: f32[1,1,1], index: 3, kind: output, shape index: {}]
  %s4 = sld [smem:[#allocation0]]
  $region26: #{tpu_custom_call.1} parent=0
    _
  %s6 = ssub.s32 1, %s4
  %s7 = scalar_select 0, %s6, %s4
  $region1: #{tpu_custom_call.1} parent=0
    #allocation2 [shape = 'u8[512]{0}', space=vmem, size = 0x400, scoped, tag = 'input window, operand 0, single buffered']
    #allocation3 [shape = 's32[1]{0}', space=sflag, size = 0x4, scoped, tag = 'scoped memory for tpu_custom_call.1']
    #allocation4 [shape = 's32[1]{0}', space=sflag, size = 0x4, scoped, tag = 'scoped memory for tpu_custom_call.1']
    #allocation5 [shape = 'u8[512]{0}', space=vmem, size = 0x400, scoped, tag = 'output window, operand 0, single buffered']
    %8 = vsyncpa [#allocation3], 0
    %9 = vsyncpa [#allocation4], 0
    // Predicated region
    $region2: #{tpu_custom_call.1} parent=1 // pred_check
      _
    $region3: #{tpu_custom_call.1} parent=1 // pred_check_branch
      %11 = sbr.rel (0) target = $region5
    $region4: #{tpu_custom_call.1} parent=1 // pred_region
      %s13 = ssub.s32 16, 16
      %14 = vsyncadd [#allocation3], %s13
      %s16 = sshll.u32 [#allocation2], 4
      %s17 = int_to_ptr.vmem [resolvable:$true] %s16
      %19 = dma.hbm_to_vmem [thread:$0]  %s0, 16, %s17, [#allocation3]
    $region5: #{tpu_custom_call.1} parent=1 // pred_fallthru
      _
    // Predicated region
    $region6: #{tpu_custom_call.1} parent=1 // pred_check
      _
    $region7: #{tpu_custom_call.1} parent=1 // pred_check_branch
      %21 = sbr.rel (0) target = $region9
    $region8: #{tpu_custom_call.1} parent=1 // pred_region
      _
    $region9: #{tpu_custom_call.1} parent=1 // pred_fallthru
      _
    // Predicated region
    $region10: #{tpu_custom_call.1} parent=1 // pred_check
      _
    $region11: #{tpu_custom_call.1} parent=1 // pred_check_branch
      %23 = sbr.rel (0) target = $region13
    $region12: #{tpu_custom_call.1} parent=1 // pred_region
      _
    $region13: #{tpu_custom_call.1} parent=1 // pred_fallthru
      _
    // Predicated region
    $region14: #{tpu_custom_call.1} parent=1 // pred_check
      _
    $region15: #{tpu_custom_call.1} parent=1 // pred_check_branch
      %25 = sbr.rel (0) target = $region17
    $region16: #{tpu_custom_call.1} parent=1 // pred_region
      %26 = dma.done [#allocation3], 16
    $region17: #{tpu_custom_call.1} parent=1 // pred_fallthru
      _
    %v27 = vld [vmem:[%s1] sm:$0x1]
    %v28 = vlaneseq
    %v29 = vand.u32 %v28, 127
    %v30 = vld [vmem:[#allocation2] sm:$0x1]
    %31 = vset.pattern.permute.xlu0 0
    %32 = vperm.xlu0 %31, %v30
    %v33 = vpop.permute.xlu0 %32
    %v34 = vlaneseq
    %v35 = vshrl.u32 %v34, 7
    %v36 = vsub.s32 0, %v35
    %v37 = vrot.slane %v33, %v36
    %vm38 = vcmp.eq.s32.totalorder %v29, %v37
    %v39 = vsel %vm38, %v27, 1.0
    %40 = vset.pattern.permute.xlu0 1
    %41 = vperm.xlu0 %40, %v30
    %v42 = vpop.permute.xlu0 %41
    %v43 = vlaneseq
    %v44 = vshrl.u32 %v43, 7
    %v45 = vsub.s32 0, %v44
    %v46 = vrot.slane %v42, %v45
    %vm47 = vcmp.eq.s32.totalorder %v29, %v46
    %v48 = vsel %vm47, %v27, %v39
    %49 = vset.pattern.permute.xlu0 2
    %50 = vperm.xlu0 %49, %v30
    %v51 = vpop.permute.xlu0 %50
    %v52 = vlaneseq
    %v53 = vshrl.u32 %v52, 7
    %v54 = vsub.s32 0, %v53
    %v55 = vrot.slane %v51, %v54
    %vm56 = vcmp.eq.s32.totalorder %v29, %v55
    %v57 = vsel %vm56, %v27, %v48
    %58 = vset.pattern.permute.xlu0 3
    %59 = vperm.xlu0 %58, %v30
    %v60 = vpop.permute.xlu0 %59
    %v61 = vlaneseq
    %v62 = vshrl.u32 %v61, 7
    %v63 = vsub.s32 0, %v62
    %v64 = vrot.slane %v60, %v63
    %vm65 = vcmp.eq.s32.totalorder %v29, %v64
    %v66 = vsel %vm65, %v27, %v57
    %67 = vset.pattern.permute.xlu0 4
    %68 = vperm.xlu0 %67, %v30
    %v69 = vpop.permute.xlu0 %68
    %v70 = vlaneseq
    %v71 = vshrl.u32 %v70, 7
    %v72 = vsub.s32 0, %v71
    %v73 = vrot.slane %v69, %v72
    %vm74 = vcmp.eq.s32.totalorder %v29, %v73
    %v75 = vsel %vm74, %v27, %v66
    %76 = vset.pattern.permute.xlu0 5
    %77 = vperm.xlu0 %76, %v30
    %v78 = vpop.permute.xlu0 %77
    %v79 = vlaneseq
    %v80 = vshrl.u32 %v79, 7
    %v81 = vsub.s32 0, %v80
    %v82 = vrot.slane %v78, %v81
    %vm83 = vcmp.eq.s32.totalorder %v29, %v82
    %v84 = vsel %vm83, %v27, %v75
    %85 = vset.pattern.permute.xlu0 6
    %86 = vperm.xlu0 %85, %v30
    %v87 = vpop.permute.xlu0 %86
    %v88 = vlaneseq
    %v89 = vshrl.u32 %v88, 7
    %v90 = vsub.s32 0, %v89
    %v91 = vrot.slane %v87, %v90
    %vm92 = vcmp.eq.s32.totalorder %v29, %v91
    %v93 = vsel %vm92, %v27, %v84
    %94 = vset.pattern.permute.xlu0 7
    %95 = vperm.xlu0 %94, %v30
    %v96 = vpop.permute.xlu0 %95
    %v97 = vlaneseq
    %v98 = vshrl.u32 %v97, 7
    %v99 = vsub.s32 0, %v98
    %v100 = vrot.slane %v96, %v99
    %vm101 = vcmp.eq.s32.totalorder %v29, %v100
    %v102 = vsel %vm101, %v27, %v93
    %103 = vset.pattern.permute.xlu0 8
    %104 = vperm.xlu0 %103, %v30
    %v105 = vpop.permute.xlu0 %104
    %v106 = vlaneseq
    %v107 = vshrl.u32 %v106, 7
    %v108 = vsub.s32 0, %v107
    %v109 = vrot.slane %v105, %v108
    %vm110 = vcmp.eq.s32.totalorder %v29, %v109
    %v111 = vsel %vm110, %v27, %v102
    %112 = vset.pattern.permute.xlu0 9
    %113 = vperm.xlu0 %112, %v30
    %v114 = vpop.permute.xlu0 %113
    %v115 = vlaneseq
    %v116 = vshrl.u32 %v115, 7
    %v117 = vsub.s32 0, %v116
    %v118 = vrot.slane %v114, %v117
    %vm119 = vcmp.eq.s32.totalorder %v29, %v118
    %v120 = vsel %vm119, %v27, %v111
    %121 = vset.pattern.permute.xlu0 10
    %122 = vperm.xlu0 %121, %v30
    %v123 = vpop.permute.xlu0 %122
    %v124 = vlaneseq
    %v125 = vshrl.u32 %v124, 7
    %v126 = vsub.s32 0, %v125
    %v127 = vrot.slane %v123, %v126
    %vm128 = vcmp.eq.s32.totalorder %v29, %v127
    %v129 = vsel %vm128, %v27, %v120
    %130 = vset.pattern.permute.xlu0 11
    %131 = vperm.xlu0 %130, %v30
    %v132 = vpop.permute.xlu0 %131
    %v133 = vlaneseq
    %v134 = vshrl.u32 %v133, 7
    %v135 = vsub.s32 0, %v134
    %v136 = vrot.slane %v132, %v135
    %vm137 = vcmp.eq.s32.totalorder %v29, %v136
    %v138 = vsel %vm137, %v27, %v129
    %139 = vset.pattern.permute.xlu0 12
    %140 = vperm.xlu0 %139, %v30
    %v141 = vpop.permute.xlu0 %140
    %v142 = vlaneseq
    %v143 = vshrl.u32 %v142, 7
    %v144 = vsub.s32 0, %v143
    %v145 = vrot.slane %v141, %v144
    %vm146 = vcmp.eq.s32.totalorder %v29, %v145
    %v147 = vsel %vm146, %v27, %v138
    %148 = vset.pattern.permute.xlu0 13
    %149 = vperm.xlu0 %148, %v30
    %v150 = vpop.permute.xlu0 %149
    %v151 = vlaneseq
    %v152 = vshrl.u32 %v151, 7
    %v153 = vsub.s32 0, %v152
    %v154 = vrot.slane %v150, %v153
    %vm155 = vcmp.eq.s32.totalorder %v29, %v154
    %v156 = vsel %vm155, %v27, %v147
    %157 = vset.pattern.permute.xlu0 14
    %158 = vperm.xlu0 %157, %v30
    %v159 = vpop.permute.xlu0 %158
    %v160 = vlaneseq
    %v161 = vshrl.u32 %v160, 7
    %v162 = vsub.s32 0, %v161
    %v163 = vrot.slane %v159, %v162
    %vm164 = vcmp.eq.s32.totalorder %v29, %v163
    %v165 = vsel %vm164, %v27, %v156
    %166 = vset.pattern.permute.xlu0 15
    %167 = vperm.xlu0 %166, %v30
    %v168 = vpop.permute.xlu0 %167
    %v169 = vlaneseq
    %v170 = vshrl.u32 %v169, 7
    %v171 = vsub.s32 0, %v170
    %v172 = vrot.slane %v168, %v171
    %vm173 = vcmp.eq.s32.totalorder %v29, %v172
    %v174 = vsel %vm173, %v27, %v165
    %v175 = vsub.f32 1.0, %v174
    %v176 = vmul.f32 %v175, %v175
    %v177 = vlog2.pop %v174
    %v178 = vmul.f32 %v177, 0.6931472
    %v179 = vsub.f32 0.0, %v178
    %v180 = vld [vmem:[%s2] sm:$0x1]
    %v181 = vmul.f32 %v180, %v176
    %v182 = vmul.f32 %v181, %v179
    %vm183 = vcmask 1040384
    %v184 = vsel %vm183, %v182, 0.0
    %185 = vadd.xlane.f32.xlu0 %v184
    %v186 = vpop.xlane.xlu0 %185
    %v187 = vlaneseq
    %v188 = vshrl.u32 %v187, 7
    %v189 = vstv 0
    %v190 = vadd.s32 %v188, %v189
    %vm191 = vcmp.lt.s32.totalorder %v190, 1
    %v192 = vsel %vm191, %v186, 0.0
    %v193 = vadd.f32 %v192, 0.0
    %s194 = vtos %v193
    %v195 = vstv %s194
    %vm196 = vcmask 0
    %197 = vst.msk [vmem:[#allocation5] sm:$0x1] %vm196, %v195
    // Predicated region
    $region18: #{tpu_custom_call.1} parent=1 // pred_check
      _
    $region19: #{tpu_custom_call.1} parent=1 // pred_check_branch
      %199 = sbr.rel (0) target = $region21
    $region20: #{tpu_custom_call.1} parent=1 // pred_region
      %s201 = ssub.s32 16, 16
      %202 = vsyncadd [#allocation4], %s201
      %s204 = sshll.u32 [#allocation5], 4
      %s205 = int_to_ptr.vmem [resolvable:$true] %s204
      %207 = dma.vmem_to_hbm [thread:$0]  %s205, 16, %s3, [#allocation4]
    $region21: #{tpu_custom_call.1} parent=1 // pred_fallthru
      _
    // Predicated region
    $region22: #{tpu_custom_call.1} parent=1 // pred_check
      _
    $region23: #{tpu_custom_call.1} parent=1 // pred_check_branch
      %209 = sbr.rel (0) target = $region25
    $region24: #{tpu_custom_call.1} parent=1 // pred_region
      %210 = dma.done [#allocation4], 16
    $region25: #{tpu_custom_call.1} parent=1 // pred_fallthru
      _
    %211 = vsyncpa [#allocation3], 1
    %212 = vsyncpa [#allocation4], 1

</llo_original>
